<compile_context>
chip_gen: v6e
topology: v6e:2x2x1
jax: 0.10.0
libtpu: 0.0.40
codegen_flags: <defaults>
</compile_context>

<pallas_src>
import functools
import math

import numpy as np
import jax
import jax.numpy as jnp
from jax import lax
from jax.experimental import pallas as pl
from jax.experimental.pallas import tpu as pltpu


# ----------------------------------------------------------------------------
# JAX glue: per-box bilinear interpolation matrices for RoIAlign
# (torchvision semantics: aligned=True, sampling_ratio=0), built with a single
# scatter-add instead of a one-hot blow-up.
# ----------------------------------------------------------------------------
def roi_align_weight_matrix(boxes, spatial_scale, H, W, res_h, res_w, max_grid):
    """boxes: (B,5) [batch_idx, x1, y1, x2, y2] -> weights (B, res_h*res_w, H*W)."""
    B = boxes.shape[0]
    HW = H * W
    offset = 0.5  # aligned=True
    x1 = boxes[:, 1] * spatial_scale - offset
    y1 = boxes[:, 2] * spatial_scale - offset
    x2 = boxes[:, 3] * spatial_scale - offset
    y2 = boxes[:, 4] * spatial_scale - offset
    roi_w = x2 - x1
    roi_h = y2 - y1
    bin_h = roi_h / res_h
    bin_w = roi_w / res_w
    grid_h = jnp.ceil(roi_h / res_h)  # sampling_ratio == 0
    grid_w = jnp.ceil(roi_w / res_w)
    count = jnp.maximum(grid_h * grid_w, 1.0)
    gh_safe = jnp.maximum(grid_h, 1.0)
    gw_safe = jnp.maximum(grid_w, 1.0)

    ph = jnp.arange(res_h, dtype=jnp.float32)
    pw = jnp.arange(res_w, dtype=jnp.float32)
    ig = jnp.arange(max_grid, dtype=jnp.float32)

    # sample coordinates: y (B, res_h, G), x (B, res_w, G)
    y = (y1[:, None, None] + ph[None, :, None] * bin_h[:, None, None]
         + (ig[None, None, :] + 0.5) * bin_h[:, None, None] / gh_safe[:, None, None])
    x = (x1[:, None, None] + pw[None, :, None] * bin_w[:, None, None]
         + (ig[None, None, :] + 0.5) * bin_w[:, None, None] / gw_safe[:, None, None])
    valid_y = ig[None, :] < grid_h[:, None]   # (B, G)
    valid_x = ig[None, :] < grid_w[:, None]   # (B, G)

    # broadcast to (B, res_h, res_w, G, G)
    Y = y[:, :, None, :, None]
    X = x[:, None, :, None, :]
    sample_valid = valid_y[:, None, None, :, None] & valid_x[:, None, None, None, :]

    inb = ~((Y < -1.0) | (Y > float(H)) | (X < -1.0) | (X > float(W)))
    Yc = jnp.maximum(Y, 0.0)
    Xc = jnp.maximum(X, 0.0)
    y_low = jnp.floor(Yc).astype(jnp.int32)
    x_low = jnp.floor(Xc).astype(jnp.int32)
    y_edge = y_low >= H - 1
    x_edge = x_low >= W - 1
    y_low = jnp.where(y_edge, H - 1, y_low)
    y_high = jnp.where(y_edge, H - 1, y_low + 1)
    Yc = jnp.where(y_edge, y_low.astype(jnp.float32), Yc)
    x_low = jnp.where(x_edge, W - 1, x_low)
    x_high = jnp.where(x_edge, W - 1, x_low + 1)
    Xc = jnp.where(x_edge, x_low.astype(jnp.float32), Xc)
    ly = Yc - y_low.astype(jnp.float32)
    lx = Xc - x_low.astype(jnp.float32)
    hy = 1.0 - ly
    hx = 1.0 - lx

    mask = (inb & sample_valid).astype(jnp.float32)
    scale = (1.0 / count)[:, None, None, None, None]

    # 4 corner contributions stacked -> single scatter-add along the HW axis.
    # TODO(synk): if this XLA scatter dominates the trace at production sizes,
    # rebuild as a segment_sum over sorted corner indices.
    cw = jnp.stack([hy * hx, hy * lx, ly * hx, ly * lx], axis=-1)
    cw = cw * (mask * scale)[..., None]                     # (B,rh,rw,G,G,4)
    cidx = jnp.stack([y_low * W + x_low, y_low * W + x_high,
                      y_high * W + x_low, y_high * W + x_high],
                     axis=-1)                               # (B,rh,rw,G,G,4)

    b_i = jnp.arange(B)[:, None, None, None, None, None]
    h_i = jnp.arange(res_h)[None, :, None, None, None, None]
    w_i = jnp.arange(res_w)[None, None, :, None, None, None]
    wmat = jnp.zeros((B, res_h, res_w, HW), dtype=jnp.float32)
    wmat = wmat.at[b_i, h_i, w_i, cidx].add(cw)
    return wmat.reshape(B, res_h * res_w, HW)


def compute_max_grid(boxes_np, spatial_scale, res_h, res_w):
    rw = (boxes_np[:, 3] - boxes_np[:, 1]) * spatial_scale
    rh = (boxes_np[:, 4] - boxes_np[:, 2]) * spatial_scale
    gh = np.ceil(rh / res_h)
    gw = np.ceil(rw / res_w)
    return int(max(gh.max(), gw.max(), 1.0))


# ----------------------------------------------------------------------------
# Fused Pallas kernel, one grid step per IMAGE:
#   (maxB*R2p, HW) @ (HW, C)  ->  per-box spatial max  ->  Linear  ->  Softmax
# ----------------------------------------------------------------------------
def _roi_head_image_kernel(wmat_ref, feat_ref, w_ref, b_ref, o_ref,
                           *, max_boxes, r2p):
    # wmat_ref : (1, max_boxes*r2p, HW)  packed bilinear weights of this image's
    #            boxes (intra-box pad rows duplicate a real row -> max-safe;
    #            empty box slots are all-zero rows -> discarded afterwards)
    # feat_ref : (1, HW, C)   pooled, channel-concatenated, HW-major feature
    #            slab of this image (no in-kernel transpose needed)
    # w_ref    : (C, NCp), b_ref : (1, NCp)   lane-padded projection params
    # o_ref    : (1, max_boxes, NCp)          softmax probabilities
    roi = jnp.dot(wmat_ref[0], feat_ref[0],
                  preferred_element_type=jnp.float32)        # (maxB*R2p, C)
    c = roi.shape[-1]
    pooled = jnp.max(roi.reshape(max_boxes, r2p, c), axis=1)  # (maxB, C) spatial max
    logits = jnp.dot(pooled, w_ref[...],
                     preferred_element_type=jnp.float32) + b_ref[...]
    m = jnp.max(logits, axis=-1, keepdims=True)
    e = jnp.exp(logits - m)                                   # padded cols: exp(-1e30-m)=0
    probs = e / jnp.sum(e, axis=-1, keepdims=True)            # exact div: 1e-5 parity
    o_ref[...] = probs[None].astype(o_ref.dtype)


def roi_head_fused(wpacked, feat, w_pad, b_pad, *, max_boxes, r2p):
    """wpacked (N, maxB*R2p, HW), feat (N, HW, C), w_pad (C, NCp), b_pad (1, NCp)."""
    N, MR, HW = wpacked.shape
    C = feat.shape[-1]
    NCp = w_pad.shape[1]

    cost = pl.CostEstimate(
        flops=int(N * (2 * MR * HW * C + 2 * max_boxes * C * NCp)),
        transcendentals=int(N * max_boxes * NCp),
        bytes_accessed=int(4 * (N * MR * HW + N * HW * C + C * NCp + NCp
                                + N * max_boxes * NCp)),
    )
    kernel = functools.partial(_roi_head_image_kernel,
                               max_boxes=max_boxes, r2p=r2p)
    return pl.pallas_call(
        kernel,
        out_shape=jax.ShapeDtypeStruct((N, max_boxes, NCp), jnp.float32),
        grid=(N,),
        in_specs=[
            pl.BlockSpec((1, MR, HW), lambda i: (i, 0, 0)),
            pl.BlockSpec((1, HW, C), lambda i: (i, 0, 0)),
            # projection params: constant block index -> DMA'd once,
            # stay resident in VMEM across grid steps
            pl.BlockSpec((C, NCp), lambda i: (0, 0)),
            pl.BlockSpec((1, NCp), lambda i: (0, 0)),
        ],
        out_specs=pl.BlockSpec((1, max_boxes, NCp), lambda i: (i, 0, 0)),
        compiler_params=pltpu.CompilerParams(
            dimension_semantics=("parallel",)),  # v7x: images split across both TCs
        cost_estimate=cost,
    )(wpacked, feat, w_pad, b_pad)


# ----------------------------------------------------------------------------
# Full ResNetRoIHead forward (Pallas path)
# ----------------------------------------------------------------------------
def resnet_roi_head_forward(inputs, bboxes, params, resolution, scale_factor,
                            max_grids):
    num_pathways = len(inputs)
    H, W = inputs[0].shape[-2:]
    shared_geometry = all(
        tuple(resolution[p]) == tuple(resolution[0])
        and scale_factor[p] == scale_factor[0]
        and inputs[p].shape[-2:] == (H, W)
        for p in range(num_pathways))
    if not shared_geometry:
        # TODO(synk): pathways with differing RoI geometry would need
        # per-pathway weight matrices + separate RoI matmuls (not required
        # for the standard SlowFast config exercised here).
        raise NotImplementedError("pathways with differing RoI geometry")

    N = inputs[0].shape[0]
    HW = H * W
    # Temporal AvgPool3d([T,1,1]) == mean over T (plain XLA), then all pathways
    # are channel-concatenated and laid out HW-major (N, HW, C_total) so the
    # RoI contraction in the kernel is a plain row-major matmul (no in-kernel
    # transpose of the feature slab, done once per image here instead).
    feat = jnp.concatenate(
        [jnp.mean(x, axis=2).transpose(0, 2, 3, 1).reshape(N, HW, x.shape[1])
         for x in inputs],
        axis=-1)                                              # (N, HW, C_total)
    C = feat.shape[-1]

    res_h, res_w = resolution[0]
    wmat = roi_align_weight_matrix(
        bboxes, 1.0 / scale_factor[0], H, W, res_h, res_w, max(max_grids))
    # Pad R2 (=49) up to a sublane multiple by DUPLICATING a real row
    # (zero-weight rows would inject 0 into the max when all values < 0).
    R2 = res_h * res_w
    R2p = -(-R2 // 8) * 8
    if R2p > R2:
        wmat = jnp.concatenate(
            [wmat, jnp.tile(wmat[:, :1, :], (1, R2p - R2, 1))], axis=1)

    # Host-side packing metadata: assign each box a (image, slot) position so
    # the kernel grids over images and each feature slab is DMA'd exactly once.
    boxes_np = np.asarray(jax.device_get(bboxes))
    B = boxes_np.shape[0]
    bidx_np = boxes_np[:, 0].astype(np.int32)
    slots_np = np.zeros(B, dtype=np.int32)
    counts = np.zeros(N, dtype=np.int32)
    for i in range(B):
        slots_np[i] = counts[bidx_np[i]]
        counts[bidx_np[i]] += 1
    max_boxes = max(int(counts.max()), 1)

    bidx = jnp.asarray(bidx_np)
    slots = jnp.asarray(slots_np)
    # Pack per-box weight slabs into per-image slots (empty slots stay zero ->
    # their outputs are finite and simply never gathered back).
    wpacked = jnp.zeros((N, max_boxes, R2p, HW), jnp.float32)
    wpacked = wpacked.at[bidx, slots].set(wmat)
    wpacked = wpacked.reshape(N, max_boxes * R2p, HW)

    # Lane-dense projection: pad num_classes to a multiple of 128 with zero
    # weight columns and -1e30 bias (zero softmax mass), slice off after.
    NC = params["w"].shape[1]
    NCp = -(-NC // 128) * 128
    w_pad = jnp.zeros((C, NCp), jnp.float32).at[:, :NC].set(params["w"])
    b_pad = jnp.full((1, NCp), -1e30, jnp.float32).at[0, :NC].set(params["b"])

    out = roi_head_fused(wpacked, feat, w_pad, b_pad,
                         max_boxes=max_boxes, r2p=R2p)        # (N, maxB, NCp)
    # TODO(synk): nn.Dropout omitted (dropout_rate=0.0 / eval mode -> identity).
    # Gather back to the original per-box order and drop class padding.
    return out[bidx, slots, :NC]


# Pure-JAX reference (per-pathway einsum path) for correctness checking.
def reference_forward(inputs, bboxes, params, resolution, scale_factor, max_grids):
    batch_idx = bboxes[:, 0].astype(jnp.int32)
    parts = []
    for p, x in enumerate(inputs):
        N, Cp, T, H, W = x.shape
        feat = jnp.mean(x, axis=2)
        feat_hwc = feat.reshape(N, Cp, H * W).transpose(0, 2, 1)
        fpb = feat_hwc[batch_idx]
        wmat = roi_align_weight_matrix(
            bboxes, 1.0 / scale_factor[p], H, W,
            resolution[p][0], resolution[p][1], max_grids[p])
        roi = jnp.einsum('brh,bhc->brc', wmat, fpb)
        parts.append(jnp.max(roi, axis=1))
    xcat = jnp.concatenate(parts, axis=1)
    logits = xcat @ params["w"] + params["b"]
    return jax.nn.softmax(logits, axis=1)


if __name__ == "__main__":
    key = jax.random.PRNGKey(0)
    k0, k1, kw, kb = jax.random.split(key, 4)

    # Small SlowFast-style configuration (2 pathways).
    dim_in = [16, 8]
    num_classes = 32
    pool_size = [[4, 1, 1], [8, 1, 1]]     # temporal kernel == T per pathway
    resolution = [[7, 7], [7, 7]]
    scale_factor = [16, 16]
    N, H, W = 2, 16, 16

    x0 = jax.random.normal(k0, (N, dim_in[0], pool_size[0][0], H, W), jnp.float32)
    x1 = jax.random.normal(k1, (N, dim_in[1], pool_size[1][0], H, W), jnp.float32)
    inputs = [x0, x1]

    # Boxes: [batch_idx, x1, y1, x2, y2] in image coords (image = 16 * 16 = 256 px).
    boxes_np = np.array(
        [
            [0.0, 10.0, 20.0, 120.0, 200.0],
            [0.0, 0.0, 0.0, 255.0, 255.0],
            [1.0, 50.0, 60.0, 100.0, 90.0],
            [1.0, 30.0, 5.0, 220.0, 140.0],
            [0.0, 100.0, 100.0, 180.0, 240.0],
            [1.0, 5.0, 200.0, 60.0, 250.0],
        ],
        dtype=np.float32,
    )
    bboxes = jnp.asarray(boxes_np)

    max_grids = [
        compute_max_grid(boxes_np, 1.0 / scale_factor[p],
                         resolution[p][0], resolution[p][1])
        for p in range(len(dim_in))
    ]

    # Deterministic Linear(sum(dim_in), num_classes) parameters.
    D = sum(dim_in)
    bound = 1.0 / math.sqrt(D)
    Wp = jax.random.uniform(kw, (D, num_classes), jnp.float32, -bound, bound)
    bp = jax.random.uniform(kb, (num_classes,), jnp.float32, -bound, bound)
    params = {"w": Wp, "b": bp}

    out = resnet_roi_head_forward(inputs, bboxes, params, resolution,
                                  scale_factor, max_grids)
    out = jax.block_until_ready(out)

    ref = reference_forward(inputs, bboxes, params, resolution,
                            scale_factor, max_grids)
    ref = jax.block_until_ready(ref)

    assert out.shape == (boxes_np.shape[0], num_classes)
    assert np.allclose(np.asarray(out), np.asarray(ref), atol=1e-5, rtol=1e-5)
    print("KERNEL_OK")
</pallas_src>

<mosaic_0001>
module attributes {stable_mosaic.version = 11 : i64} {
  func.func @_roi_head_image_kernel(%arg0: i32, %arg1: memref<1x168x256xf32, #tpu.memory_space<vmem>>, %arg2: memref<1x256x24xf32, #tpu.memory_space<vmem>>, %arg3: memref<24x128xf32, #tpu.memory_space<vmem>>, %arg4: memref<1x128xf32, #tpu.memory_space<vmem>>, %arg5: memref<1x3x128xf32, #tpu.memory_space<vmem>>) attributes {dimension_semantics = [#tpu.dimension_semantics<parallel>], iteration_bounds = array<i64: 2>, scalar_prefetch = 0 : i64, scratch_operands = 0 : i64, tpu.core_type = #tpu.core_type<tc>, window_params = [{transform_indices = @transform_0, window_bounds = array<i64: 1, 168, 256>}, {transform_indices = @transform_1, window_bounds = array<i64: 1, 256, 24>}, {pipeline_mode = #tpu.pipeline_mode<synchronous>, transform_indices = @transform_2, window_bounds = array<i64: 24, 128>}, {pipeline_mode = #tpu.pipeline_mode<synchronous>, transform_indices = @transform_3, window_bounds = array<i64: 1, 128>}, {transform_indices = @transform_4, window_bounds = array<i64: 1, 3, 128>}]} {
    %c0 = arith.constant 0 : index
    %c0_0 = arith.constant 0 : index
    %c0_1 = arith.constant 0 : index
    %0 = vector.load %arg1[%c0, %c0_0, %c0_1] : memref<1x168x256xf32, #tpu.memory_space<vmem>>, vector<1x168x256xf32>
    %1 = vector.shape_cast %0 : vector<1x168x256xf32> to vector<168x256xf32>
    %c0_2 = arith.constant 0 : index
    %c0_3 = arith.constant 0 : index
    %c0_4 = arith.constant 0 : index
    %2 = vector.load %arg2[%c0_2, %c0_3, %c0_4] : memref<1x256x24xf32, #tpu.memory_space<vmem>>, vector<1x256x24xf32>
    %3 = vector.shape_cast %2 : vector<1x256x24xf32> to vector<256x24xf32>
    %cst = arith.constant dense<0.000000e+00> : vector<168x24xf32>
    %4 = tpu.matmul %1, %3, %cst {dimension_numbers = #tpu.dot_dimension_numbers<[1], [0], [0], [1], [0, 0, 1, 1], [], []>} : vector<168x256xf32>, vector<256x24xf32>, vector<168x24xf32> -> vector<168x24xf32>
    %5 = vector.shape_cast %4 : vector<168x24xf32> to vector<3x56x24xf32>
    %cst_5 = arith.constant dense<0xFF800000> : vector<3x24xf32>
    %6 = vector.multi_reduction <maximumf>, %5, %cst_5 [1] : vector<3x56x24xf32> to vector<3x24xf32>
    %c0_6 = arith.constant 0 : index
    %c0_7 = arith.constant 0 : index
    %7 = vector.load %arg3[%c0_6, %c0_7] : memref<24x128xf32, #tpu.memory_space<vmem>>, vector<24x128xf32>
    %cst_8 = arith.constant dense<0.000000e+00> : vector<3x128xf32>
    %8 = tpu.matmul %6, %7, %cst_8 {dimension_numbers = #tpu.dot_dimension_numbers<[1], [0], [0], [1], [0, 0, 1, 1], [], []>} : vector<3x24xf32>, vector<24x128xf32>, vector<3x128xf32> -> vector<3x128xf32>
    %c0_9 = arith.constant 0 : index
    %c0_10 = arith.constant 0 : index
    %9 = vector.load %arg4[%c0_9, %c0_10] : memref<1x128xf32, #tpu.memory_space<vmem>>, vector<1x128xf32>
    %10 = vector.broadcast %9 : vector<1x128xf32> to vector<3x128xf32>
    %11 = arith.addf %8, %10 : vector<3x128xf32>
    %cst_11 = arith.constant dense<0xFF800000> : vector<3xf32>
    %12 = vector.multi_reduction <maximumf>, %11, %cst_11 [1] : vector<3x128xf32> to vector<3xf32>
    %13 = vector.shape_cast %12 : vector<3xf32> to vector<3x1xf32>
    %14 = vector.broadcast %13 : vector<3x1xf32> to vector<3x128xf32>
    %15 = arith.subf %11, %14 : vector<3x128xf32>
    %16 = math.exp %15 : vector<3x128xf32>
    %cst_12 = arith.constant dense<0.000000e+00> : vector<3xf32>
    %17 = vector.multi_reduction <add>, %16, %cst_12 [1] : vector<3x128xf32> to vector<3xf32>
    %18 = vector.shape_cast %17 : vector<3xf32> to vector<3x1xf32>
    %19 = vector.broadcast %18 : vector<3x1xf32> to vector<3x128xf32>
    %20 = arith.divf %16, %19 : vector<3x128xf32>
    %21 = vector.shape_cast %20 : vector<3x128xf32> to vector<1x3x128xf32>
    %c0_13 = arith.constant 0 : index
    %c0_14 = arith.constant 0 : index
    %c0_15 = arith.constant 0 : index
    %22 = vector.load %arg5[%c0_13, %c0_14, %c0_15] : memref<1x3x128xf32, #tpu.memory_space<vmem>>, vector<1x3x128xf32>
    tpu.vector_store %arg5[%c0_13, %c0_14, %c0_15], %21 {strides = array<i32>} : memref<1x3x128xf32, #tpu.memory_space<vmem>>, vector<1x3x128xf32>,
    return
  }
  func.func @transform_0(%arg0: i32) -> (i32, i32, i32) {
    %c0_i32 = arith.constant 0 : i32
    %c0_i32_0 = arith.constant 0 : i32
    %c0_i32_1 = arith.constant 0 : i32
    return %arg0, %c0_i32, %c0_i32_0 : i32, i32, i32
  }
  func.func @transform_1(%arg0: i32) -> (i32, i32, i32) {
    %c0_i32 = arith.constant 0 : i32
    %c0_i32_0 = arith.constant 0 : i32
    %c0_i32_1 = arith.constant 0 : i32
    return %arg0, %c0_i32, %c0_i32_0 : i32, i32, i32
  }
  func.func @transform_2(%arg0: i32) -> (i32, i32) {
    %c0_i32 = arith.constant 0 : i32
    %c0_i32_0 = arith.constant 0 : i32
    %c0_i32_1 = arith.constant 0 : i32
    return %c0_i32, %c0_i32_0 : i32, i32
  }
  func.func @transform_3(%arg0: i32) -> (i32, i32) {
    %c0_i32 = arith.constant 0 : i32
    %c0_i32_0 = arith.constant 0 : i32
    %c0_i32_1 = arith.constant 0 : i32
    return %c0_i32, %c0_i32_0 : i32, i32
  }
  func.func @transform_4(%arg0: i32) -> (i32, i32, i32) {
    %c0_i32 = arith.constant 0 : i32
    %c0_i32_0 = arith.constant 0 : i32
    %c0_i32_1 = arith.constant 0 : i32
    return %arg0, %c0_i32, %c0_i32_0 : i32, i32, i32
  }
}

</mosaic_0001>

<llo_original>
// kernel: tpu_custom_call.1
$region0: #{tpu_custom_call.1}
  #allocation0 [shape = 'u32[]', space=smem, size = 0x4, offset = 0x4, fixed_abs, tag = 'smem constant byte address 0x4 - core index']
  #allocation1 [shape = 'u32[144,128]{1,0:T(1,128)}', space=vmem, size = 0x12000, scoped, tag = 'internal scratch']
  %s0 = inlined_call_operand.hbm [shape: f32[2,168,256], index: 0, kind: input, shape index: {}]
  %s1 = inlined_call_operand.vmem [shape: f32[2,256,24], index: 1, kind: input, shape index: {}]
  %s2 = inlined_call_operand.vmem [shape: f32[24,128], index: 2, kind: input, shape index: {}]
  %s3 = inlined_call_operand.vmem [shape: f32[1,128], index: 3, kind: input, shape index: {}]
  %s4 = inlined_call_operand.vmem [shape: f32[2,3,128], index: 4, kind: output, shape index: {}]
  %s5 = sld [smem:[#allocation0]]
  $region53: #{tpu_custom_call.1} parent=0
    _
  %s7 = ssub.s32 1, %s5
  %s8 = scalar_select 0, %s7, %s5
  $region1: #{tpu_custom_call.1} parent=0
    #allocation2 [shape = 'u8[344064]{0}', space=vmem, size = 0x54000, scoped, tag = 'input window, operand 0']
    #allocation3 [shape = 's32[2]{0}', space=sflag, size = 0x8, scoped, tag = 'scoped memory for tpu_custom_call.1']
    %9 = vsyncpa [#allocation3], 0
    %s10 = scalar_lea.sflag [#allocation3], 1
    %11 = vsyncpa %s10, 0
    loop: start=0, step=1, limit=4
    $region2: #{tpu_custom_call.1} parent=1 // loop_pre_header
      _
    $region3: #{tpu_custom_call.1} parent=1 // loop_header
      %s13 = sphi 0, %s17
      %p14 = scmp.ge.s32.totalorder %s13, 4
      %s23 = sphi 0, %s25
      %s26 = sphi 0, %s23
      %s27 = sphi 0, %s26
      %s43 = sphi 0, %s27
      %s49 = sphi 0, %s51
      %s52 = sphi 0, %s49
      %s53 = sphi 0, %s52
      %s69 = sphi 0, %s53
      %s73 = sphi 0, %s73
      %s75 = sphi 0, %s73
      %s76 = sphi 0, %s75
      %s90 = sphi 0, %s76
      %s94 = sphi 0, %s94
      %s96 = sphi 0, %s94
      %s97 = sphi 0, %s96
      %s111 = sphi 0, %s97
      %s117 = sphi 0, %s119
      %s120 = sphi 0, %s117
      %s121 = sphi 0, %s120
      %s137 = sphi 0, %s121
    $region4: #{tpu_custom_call.1} parent=1 // loop_header_branch
      %16 = sbr.rel (%p14) target = $region8
    $region5: #{tpu_custom_call.1} parent=1 // loop_body
      %s18 = ssub.s32 %s13, 1
      %s19 = ssub.s32 %s13, 2
      %s20 = sadd.s32 %s13, 1
      %s21 = ssub.s32 %s13, %s20
      %p22 = scmp.eq.s32.totalorder %s21, 0
      %s24 = sadd.s32 %s23, 1
      %s25 = scalar_select %p22, %s23, %s24
      %p28 = pneg %p22
      %p29 = scmp.eq.s32.totalorder %s13, 1
      %p30 = por %p28, %p29
      %p31 = scmp.ne.s32.totalorder %s23, %s26
      %p32 = scmp.eq.s32.totalorder %s13, 0
      %p33 = por %p31, %p32
      %p34 = scmp.ne.s32.totalorder %s23, %s26
      %p35 = scmp.eq.s32.totalorder %s18, 1
      %p36 = por %p34, %p35
      %p37 = scmp.ne.s32.totalorder %s26, %s27
      %p38 = scmp.eq.s32.totalorder %s18, 0
      %p39 = por %p37, %p38
      %p40 = scmp.ne.s32.totalorder %s26, %s27
      %p41 = scmp.eq.s32.totalorder %s19, 1
      %p42 = por %p40, %p41
      %p44 = scmp.ne.s32.totalorder %s27, %s43
      %p45 = scmp.eq.s32.totalorder %s19, 0
      %p46 = por %p44, %p45
      %s47 = ssub.s32 %s13, %s20
      %p48 = scmp.eq.s32.totalorder %s47, 0
      %s50 = sadd.s32 %s49, 1
      %s51 = scalar_select %p48, %s49, %s50
      %p54 = pneg %p48
      %p55 = scmp.eq.s32.totalorder %s13, 1
      %p56 = por %p54, %p55
      %p57 = scmp.ne.s32.totalorder %s49, %s52
      %p58 = scmp.eq.s32.totalorder %s13, 0
      %p59 = por %p57, %p58
      %p60 = scmp.ne.s32.totalorder %s49, %s52
      %p61 = scmp.eq.s32.totalorder %s18, 1
      %p62 = por %p60, %p61
      %p63 = scmp.ne.s32.totalorder %s52, %s53
      %p64 = scmp.eq.s32.totalorder %s18, 0
      %p65 = por %p63, %p64
      %p66 = scmp.ne.s32.totalorder %s52, %s53
      %p67 = scmp.eq.s32.totalorder %s19, 1
      %p68 = por %p66, %p67
      %p70 = scmp.ne.s32.totalorder %s53, %s69
      %p71 = scmp.eq.s32.totalorder %s19, 0
      %p72 = por %p70, %p71
      %s74 = sadd.s32 %s73, 1
      %p77 = scmp.eq.s32.totalorder %s13, 1
      %p78 = scmp.ne.s32.totalorder %s73, %s75
      %p79 = scmp.eq.s32.totalorder %s13, 0
      %p80 = por %p78, %p79
      %p81 = scmp.ne.s32.totalorder %s73, %s75
      %p82 = scmp.eq.s32.totalorder %s18, 1
      %p83 = por %p81, %p82
      %p84 = scmp.ne.s32.totalorder %s75, %s76
      %p85 = scmp.eq.s32.totalorder %s18, 0
      %p86 = por %p84, %p85
      %p87 = scmp.ne.s32.totalorder %s75, %s76
      %p88 = scmp.eq.s32.totalorder %s19, 1
      %p89 = por %p87, %p88
      %p91 = scmp.ne.s32.totalorder %s76, %s90
      %p92 = scmp.eq.s32.totalorder %s19, 0
      %p93 = por %p91, %p92
      %s95 = sadd.s32 %s94, 1
      %p98 = scmp.eq.s32.totalorder %s13, 1
      %p99 = scmp.ne.s32.totalorder %s94, %s96
      %p100 = scmp.eq.s32.totalorder %s13, 0
      %p101 = por %p99, %p100
      %p102 = scmp.ne.s32.totalorder %s94, %s96
      %p103 = scmp.eq.s32.totalorder %s18, 1
      %p104 = por %p102, %p103
      %p105 = scmp.ne.s32.totalorder %s96, %s97
      %p106 = scmp.eq.s32.totalorder %s18, 0
      %p107 = por %p105, %p106
      %p108 = scmp.ne.s32.totalorder %s96, %s97
      %p109 = scmp.eq.s32.totalorder %s19, 1
      %p110 = por %p108, %p109
      %p112 = scmp.ne.s32.totalorder %s97, %s111
      %p113 = scmp.eq.s32.totalorder %s19, 0
      %p114 = por %p112, %p113
      %s115 = ssub.s32 %s13, %s20
      %p116 = scmp.eq.s32.totalorder %s115, 0
      %s118 = sadd.s32 %s117, 1
      %s119 = scalar_select %p116, %s117, %s118
      %p122 = pneg %p116
      %p123 = scmp.eq.s32.totalorder %s13, 1
      %p124 = por %p122, %p123
      %p125 = scmp.ne.s32.totalorder %s117, %s120
      %p126 = scmp.eq.s32.totalorder %s13, 0
      %p127 = por %p125, %p126
      %p128 = scmp.ne.s32.totalorder %s117, %s120
      %p129 = scmp.eq.s32.totalorder %s18, 1
      %p130 = por %p128, %p129
      %p131 = scmp.ne.s32.totalorder %s120, %s121
      %p132 = scmp.eq.s32.totalorder %s18, 0
      %p133 = por %p131, %p132
      %p134 = scmp.ne.s32.totalorder %s120, %s121
      %p135 = scmp.eq.s32.totalorder %s19, 1
      %p136 = por %p134, %p135
      %p138 = scmp.ne.s32.totalorder %s121, %s137
      %p139 = scmp.eq.s32.totalorder %s19, 0
      %p140 = por %p138, %p139
      %p141 = scmp.le.s32.totalorder 1, %s13
      %p142 = scmp.lt.s32.totalorder %s13, 3
      %p143 = pnand %p141, %p142
      %p144 = pneg %p143
      // Predicated region
      $region9: #{tpu_custom_call.1} parent=5 // pred_check
        _
      $region10: #{tpu_custom_call.1} parent=5 // pred_check_branch
        %146 = sbr.rel (%p143) target = $region12
      $region11: #{tpu_custom_call.1} parent=5 // pred_region
        %s147 = ssub.s32 %s13, 1
        // Predicated region
        $region13: #{tpu_custom_call.1} parent=11 // pred_check
          %p148 = pneg %p86
        $region14: #{tpu_custom_call.1} parent=11 // pred_check_branch
          %150 = sbr.rel (%p148) target = $region16
        $region15: #{tpu_custom_call.1} parent=11 // pred_region
          _
        $region16: #{tpu_custom_call.1} parent=11 // pred_fallthru
          _
        // Predicated region
        $region17: #{tpu_custom_call.1} parent=11 // pred_check
          %p151 = pneg %p107
        $region18: #{tpu_custom_call.1} parent=11 // pred_check_branch
          %153 = sbr.rel (%p151) target = $region20
        $region19: #{tpu_custom_call.1} parent=11 // pred_region
          _
        $region20: #{tpu_custom_call.1} parent=11 // pred_fallthru
          _
      $region12: #{tpu_custom_call.1} parent=5 // pred_fallthru
        _
      %p154 = scmp.lt.s32.totalorder %s13, 2
      // Predicated region
      $region21: #{tpu_custom_call.1} parent=5 // pred_check
        %p155 = pneg %p154
      $region22: #{tpu_custom_call.1} parent=5 // pred_check_branch
        %157 = sbr.rel (%p155) target = $region24
      $region23: #{tpu_custom_call.1} parent=5 // pred_region
        // Predicated region
        $region25: #{tpu_custom_call.1} parent=23 // pred_check
          %p158 = pneg %p33
        $region26: #{tpu_custom_call.1} parent=23 // pred_check_branch
          %160 = sbr.rel (%p158) target = $region28
        $region27: #{tpu_custom_call.1} parent=23 // pred_region
          %s161 = sand.u32 %s23, 1
          %s162 = scalar_lea.sflag [#allocation3], %s161
          %s163 = sand.u32 %s23, 1
          %s164 = smul.addr %s163, 336
          %s165 = scalar_lea.vmem [#allocation2], %s164
          %s167 = ssub.s32 5376, 5376
          %168 = vsyncadd %s162, %s167
          %s169 = smul.addr %s13, 42
          %s170 = smul.addr %s169, 128
          %s171 = scalar_lea.hbm %s0, %s170
          %s172 = sshll.u32 %s165, 4
          %s173 = int_to_ptr.vmem [resolvable:$true] %s172
          %178 = dma.hbm_to_vmem [thread:$0]  %s171, 5376, %s173, %s162, 256, 256, 16
        $region28: #{tpu_custom_call.1} parent=23 // pred_fallthru
          _
        // Predicated region
        $region29: #{tpu_custom_call.1} parent=23 // pred_check
          %p179 = pneg %p59
        $region30: #{tpu_custom_call.1} parent=23 // pred_check_branch
          %181 = sbr.rel (%p179) target = $region32
        $region31: #{tpu_custom_call.1} parent=23 // pred_region
          %p182 = scmp.lt.s32.totalorder %s13, 1
          %s183 = scalar_select %p182, %s13, 1
          %s184 = smul.addr %s183, 32
          %s185 = smul.addr %s184, 8
          %s186 = scalar_lea.vmem %s1, %s185
        $region32: #{tpu_custom_call.1} parent=23 // pred_fallthru
          _
      $region24: #{tpu_custom_call.1} parent=5 // pred_fallthru
        _
      %p187 = scmp.le.s32.totalorder 1, %s13
      %p188 = scmp.lt.s32.totalorder %s13, 3
      %p189 = pnand %p187, %p188
      %p190 = pneg %p189
      // Predicated region
      $region33: #{tpu_custom_call.1} parent=5 // pred_check
        _
      $region34: #{tpu_custom_call.1} parent=5 // pred_check_branch
        %192 = sbr.rel (%p189) target = $region36
      $region35: #{tpu_custom_call.1} parent=5 // pred_region
        %s193 = ssub.s32 %s13, 1
        %s194 = sand.u32 %s26, 1
        %s195 = scalar_lea.sflag [#allocation3], %s194
        %s196 = sand.u32 %s26, 1
        %s197 = smul.addr %s196, 336
        %s198 = scalar_lea.vmem [#allocation2], %s197
        // Predicated region
        $region37: #{tpu_custom_call.1} parent=35 // pred_check
          %p199 = pneg %p39
        $region38: #{tpu_custom_call.1} parent=35 // pred_check_branch
          %201 = sbr.rel (%p199) target = $region40
        $region39: #{tpu_custom_call.1} parent=35 // pred_region
          %202 = dma.done %s195, 5376
        $region40: #{tpu_custom_call.1} parent=35 // pred_fallthru
          _
        %s203 = sand.u32 %s26, 1
        %s204 = scalar_lea.sflag [#allocation3], %s203
        %s205 = sand.u32 %s26, 1
        %s206 = smul.addr %s205, 336
        %s207 = scalar_lea.vmem [#allocation2], %s206
        %p208 = pneg %p39
        %p209 = pneg %p36
        %p210 = scmp.lt.s32.totalorder %s18, 1
        %s211 = scalar_select %p210, %s18, 1
        %s212 = smul.addr %s211, 32
        %s213 = smul.addr %s212, 8
        %s214 = scalar_lea.vmem %s1, %s213
        %p215 = pneg %p65
        %p216 = pneg %p62
        %p217 = pneg %p86
        %p218 = pneg %p83
        %p219 = pneg %p107
        %p220 = pneg %p104
        %p221 = pneg %p133
        %p222 = pneg %p130
        %p223 = scmp.lt.s32.totalorder %s18, 1
        %s224 = scalar_select %p223, %s18, 1
        %s225 = smul.addr %s224, 4
        %s226 = scalar_lea.vmem %s4, %s225
        %p227 = scmp.lt.s32.totalorder %s18, 1
        %s228 = scalar_select %p227, %s18, 1
        %s229 = smul.addr %s228, 32
        %s230 = smul.addr %s229, 8
        %s231 = scalar_lea.vmem %s1, %s230
        %p232 = scmp.lt.s32.totalorder %s18, 1
        %s233 = scalar_select %p232, %s18, 1
        %s234 = smul.addr %s233, 4
        %s235 = scalar_lea.vmem %s4, %s234
        %v236 = vld [vmem:[%s198] sm:$0xff]
        %v237 = vld [vmem:[%s198 + $0x8] sm:$0xff]
        %v238 = vld [vmem:[%s198 + $0x10] sm:$0xff]
        %v239 = vld [vmem:[%s198 + $0x18] sm:$0xff]
        %v240 = vld [vmem:[%s198 + $0x20] sm:$0xff]
        %v241 = vld [vmem:[%s198 + $0x28] sm:$0xff]
        %v242 = vld [vmem:[%s198 + $0x30] sm:$0xff]
        %v243 = vld [vmem:[%s198 + $0x38] sm:$0xff]
        %v244 = vld [vmem:[%s198 + $0x40] sm:$0xff]
        %v245 = vld [vmem:[%s198 + $0x48] sm:$0xff]
        %v246 = vld [vmem:[%s198 + $0x50] sm:$0xff]
        %v247 = vld [vmem:[%s198 + $0x58] sm:$0xff]
        %v248 = vld [vmem:[%s198 + $0x60] sm:$0xff]
        %v249 = vld [vmem:[%s198 + $0x68] sm:$0xff]
        %v250 = vld [vmem:[%s198 + $0x70] sm:$0xff]
        %v251 = vld [vmem:[%s198 + $0x78] sm:$0xff]
        %v252 = vld [vmem:[%s198 + $0x80] sm:$0xff]
        %v253 = vld [vmem:[%s198 + $0x88] sm:$0xff]
        %v254 = vld [vmem:[%s198 + $0x90] sm:$0xff]
        %v255 = vld [vmem:[%s198 + $0x98] sm:$0xff]
        %v256 = vld [vmem:[%s198 + $0xa0] sm:$0xff]
        %v257 = vld [vmem:[%s198 + $0xa8] sm:$0xff]
        %v258 = vld [vmem:[%s198 + $0xb0] sm:$0xff]
        %v259 = vld [vmem:[%s198 + $0xb8] sm:$0xff]
        %v260 = vld [vmem:[%s198 + $0xc0] sm:$0xff]
        %v261 = vld [vmem:[%s198 + $0xc8] sm:$0xff]
        %v262 = vld [vmem:[%s198 + $0xd0] sm:$0xff]
        %v263 = vld [vmem:[%s198 + $0xd8] sm:$0xff]
        %v264 = vld [vmem:[%s198 + $0xe0] sm:$0xff]
        %v265 = vld [vmem:[%s198 + $0xe8] sm:$0xff]
        %v266 = vld [vmem:[%s198 + $0xf0] sm:$0xff]
        %v267 = vld [vmem:[%s198 + $0xf8] sm:$0xff]
        %v268 = vld [vmem:[%s198 + $0x100] sm:$0xff]
        %v269 = vld [vmem:[%s198 + $0x108] sm:$0xff]
        %v270 = vld [vmem:[%s198 + $0x110] sm:$0xff]
        %v271 = vld [vmem:[%s198 + $0x118] sm:$0xff]
        %v272 = vld [vmem:[%s198 + $0x120] sm:$0xff]
        %v273 = vld [vmem:[%s198 + $0x128] sm:$0xff]
        %v274 = vld [vmem:[%s198 + $0x130] sm:$0xff]
        %v275 = vld [vmem:[%s198 + $0x138] sm:$0xff]
        %v276 = vld [vmem:[%s198 + $0x140] sm:$0xff]
        %v277 = vld [vmem:[%s198 + $0x148] sm:$0xff]
        %v278 = vld [vmem:[%s231] sm:$0xff]
        %v279 = vld [vmem:[%s231 + $0x8] sm:$0xff]
        %v280 = vld [vmem:[%s231 + $0x10] sm:$0xff]
        %v281 = vld [vmem:[%s231 + $0x18] sm:$0xff]
        %v282 = vld [vmem:[%s231 + $0x20] sm:$0xff]
        %v283 = vld [vmem:[%s231 + $0x28] sm:$0xff]
        %v284 = vld [vmem:[%s231 + $0x30] sm:$0xff]
        %v285 = vld [vmem:[%s231 + $0x38] sm:$0xff]
        %v286 = vld [vmem:[%s231 + $0x40] sm:$0xff]
        %v287 = vld [vmem:[%s231 + $0x48] sm:$0xff]
        %v288 = vld [vmem:[%s231 + $0x50] sm:$0xff]
        %v289 = vld [vmem:[%s231 + $0x58] sm:$0xff]
        %v290 = vld [vmem:[%s231 + $0x60] sm:$0xff]
        %v291 = vld [vmem:[%s231 + $0x68] sm:$0xff]
        %v292 = vld [vmem:[%s231 + $0x70] sm:$0xff]
        %v293 = vld [vmem:[%s231 + $0x78] sm:$0xff]
        %v294 = vld [vmem:[%s231 + $0x80] sm:$0xff]
        %v295 = vld [vmem:[%s231 + $0x88] sm:$0xff]
        %v296 = vld [vmem:[%s231 + $0x90] sm:$0xff]
        %v297 = vld [vmem:[%s231 + $0x98] sm:$0xff]
        %v298 = vld [vmem:[%s231 + $0xa0] sm:$0xff]
        %v299 = vld [vmem:[%s231 + $0xa8] sm:$0xff]
        %v300 = vld [vmem:[%s231 + $0xb0] sm:$0xff]
        %v301 = vld [vmem:[%s231 + $0xb8] sm:$0xff]
        %v302 = vld [vmem:[%s231 + $0xc0] sm:$0xff]
        %v303 = vld [vmem:[%s231 + $0xc8] sm:$0xff]
        %v304 = vld [vmem:[%s231 + $0xd0] sm:$0xff]
        %v305 = vld [vmem:[%s231 + $0xd8] sm:$0xff]
        %v306 = vld [vmem:[%s231 + $0xe0] sm:$0xff]
        %v307 = vld [vmem:[%s231 + $0xe8] sm:$0xff]
        %v308 = vld [vmem:[%s231 + $0xf0] sm:$0xff]
        %v309 = vld [vmem:[%s231 + $0xf8] sm:$0xff]
        %310 = vmatprep.subr.mxu0 0.0
        %311 = vmatpush1.msra.mxu0 %v293
        %312 = vmatprep.subr.mxu0 0.0
        %313 = vmatpush1.msra.mxu0 %v292
        %314 = vmatprep.subr.mxu0 0.0
        %315 = vmatpush1.msra.mxu0 %v291
        %316 = vmatprep.subr.mxu0 0.0
        %317 = vmatpush1.msra.mxu0 %v290
        %318 = vmatprep.subr.mxu0 0.0
        %319 = vmatpush1.msra.mxu0 %v289
        %320 = vmatprep.subr.mxu0 0.0
        %321 = vmatpush1.msra.mxu0 %v288
        %322 = vmatprep.subr.mxu0 0.0
        %323 = vmatpush1.msra.mxu0 %v287
        %324 = vmatprep.subr.mxu0 0.0
        %325 = vmatpush1.msra.mxu0 %v286
        %326 = vmatprep.subr.mxu0 0.0
        %327 = vmatpush1.msra.mxu0 %v285
        %328 = vmatprep.subr.mxu0 0.0
        %329 = vmatpush1.msra.mxu0 %v284
        %330 = vmatprep.subr.mxu0 0.0
        %331 = vmatpush1.msra.mxu0 %v283
        %332 = vmatprep.subr.mxu0 0.0
        %333 = vmatpush1.msra.mxu0 %v282
        %334 = vmatprep.subr.mxu0 0.0
        %335 = vmatpush1.msra.mxu0 %v281
        %336 = vmatprep.subr.mxu0 0.0
        %337 = vmatpush1.msra.mxu0 %v280
        %338 = vmatprep.subr.mxu0 0.0
        %339 = vmatpush1.msra.mxu0 %v279
        %340 = vmatprep.subr.mxu0 0.0
        %341 = vmatpush1.msra.mxu0 %v278
        %342 = vmatprep.subr.mxu0 0.0
        %343 = vmatpush2.msra.mxu0 %v309
        %344 = vmatprep.subr.mxu0 0.0
        %345 = vmatpush2.msra.mxu0 %v308
        %346 = vmatprep.subr.mxu0 0.0
        %347 = vmatpush2.msra.mxu0 %v307
        %348 = vmatprep.subr.mxu0 0.0
        %349 = vmatpush2.msra.mxu0 %v306
        %350 = vmatprep.subr.mxu0 0.0
        %351 = vmatpush2.msra.mxu0 %v305
        %352 = vmatprep.subr.mxu0 0.0
        %353 = vmatpush2.msra.mxu0 %v304
        %354 = vmatprep.subr.mxu0 0.0
        %355 = vmatpush2.msra.mxu0 %v303
        %356 = vmatprep.subr.mxu0 0.0
        %357 = vmatpush2.msra.mxu0 %v302
        %358 = vmatprep.subr.mxu0 0.0
        %359 = vmatpush2.msra.mxu0 %v301
        %360 = vmatprep.subr.mxu0 0.0
        %361 = vmatpush2.msra.mxu0 %v300
        %362 = vmatprep.subr.mxu0 0.0
        %363 = vmatpush2.msra.mxu0 %v299
        %364 = vmatprep.subr.mxu0 0.0
        %365 = vmatpush2.msra.mxu0 %v298
        %366 = vmatprep.subr.mxu0 0.0
        %367 = vmatpush2.msra.mxu0 %v297
        %368 = vmatprep.subr.mxu0 0.0
        %369 = vmatpush2.msra.mxu0 %v296
        %370 = vmatprep.subr.mxu0 0.0
        %371 = vmatpush2.msra.mxu0 %v295
        %372 = vmatprep.subr.mxu0 0.0
        %373 = vmatpush2.msra.mxu0 %v294
        %374 = vmatprep.mubr.f32.mxu0 %v237
        %375 = vmatmul.mubr.f32.gmra.mxu0 %v236
        %v376 = vpop.f32.mrf.mxu0
        %v377 = vadd.f32 0.0, %v376
        %v378 = vpop.f32.mrf.mxu0
        %379 = vmatprep.mubr.f32.mxu0 %v239
        %380 = vmatmul.mubr.f32.gmra.mxu0 %v238
        %v381 = vpop.f32.mrf.mxu0
        %v382 = vadd.f32 0.0, %v381
        %v383 = vpop.f32.mrf.mxu0
        %384 = vmatprep.mubr.f32.mxu0 %v241
        %385 = vmatmul.mubr.f32.gmra.mxu0 %v240
        %v386 = vpop.f32.mrf.mxu0
        %v387 = vadd.f32 0.0, %v386
        %v388 = vpop.f32.mrf.mxu0
        %389 = vmatprep.mubr.f32.mxu0 %v243
        %390 = vmatmul.mubr.f32.gmra.mxu0 %v242
        %v391 = vpop.f32.mrf.mxu0
        %v392 = vadd.f32 0.0, %v391
        %v393 = vpop.f32.mrf.mxu0
        %394 = vmatprep.mubr.f32.mxu0 %v245
        %395 = vmatmul.mubr.f32.gmra.mxu0 %v244
        %v396 = vpop.f32.mrf.mxu0
        %v397 = vadd.f32 0.0, %v396
        %v398 = vpop.f32.mrf.mxu0
        %399 = vmatprep.mubr.f32.mxu0 %v247
        %400 = vmatmul.mubr.f32.gmra.mxu0 %v246
        %v401 = vpop.f32.mrf.mxu0
        %v402 = vadd.f32 0.0, %v401
        %v403 = vpop.f32.mrf.mxu0
        %404 = vmatprep.mubr.f32.mxu0 %v249
        %405 = vmatmul.mubr.f32.gmra.mxu0 %v248
        %v406 = vpop.f32.mrf.mxu0
        %v407 = vadd.f32 0.0, %v406
        %v408 = vpop.f32.mrf.mxu0
        %409 = vmatprep.mubr.f32.mxu0 %v251
        %410 = vmatmul.mubr.f32.gmra.mxu0 %v250
        %v411 = vpop.f32.mrf.mxu0
        %v412 = vadd.f32 0.0, %v411
        %v413 = vpop.f32.mrf.mxu0
        %414 = vmatprep.mubr.f32.mxu0 %v253
        %415 = vmatmul.mubr.f32.gmra.mxu0 %v252
        %v416 = vpop.f32.mrf.mxu0
        %v417 = vadd.f32 0.0, %v416
        %v418 = vpop.f32.mrf.mxu0
        %419 = vmatprep.mubr.f32.mxu0 %v255
        %420 = vmatmul.mubr.f32.gmra.mxu0 %v254
        %v421 = vpop.f32.mrf.mxu0
        %v422 = vadd.f32 0.0, %v421
        %v423 = vpop.f32.mrf.mxu0
        %424 = vmatprep.mubr.f32.mxu0 %v257
        %425 = vmatmul.mubr.f32.gmra.mxu0 %v256
        %v426 = vpop.f32.mrf.mxu0
        %v427 = vadd.f32 0.0, %v426
        %v428 = vpop.f32.mrf.mxu0
        %429 = vmatprep.mubr.f32.mxu0 %v259
        %430 = vmatmul.mubr.f32.gmra.mxu0 %v258
        %v431 = vpop.f32.mrf.mxu0
        %v432 = vadd.f32 0.0, %v431
        %v433 = vpop.f32.mrf.mxu0
        %434 = vmatprep.mubr.f32.mxu0 %v261
        %435 = vmatmul.mubr.f32.gmra.mxu0 %v260
        %v436 = vpop.f32.mrf.mxu0
        %v437 = vadd.f32 0.0, %v436
        %v438 = vpop.f32.mrf.mxu0
        %439 = vmatprep.mubr.f32.mxu0 %v263
        %440 = vmatmul.mubr.f32.gmra.mxu0 %v262
        %v441 = vpop.f32.mrf.mxu0
        %v442 = vadd.f32 0.0, %v441
        %v443 = vpop.f32.mrf.mxu0
        %444 = vmatprep.mubr.f32.mxu0 %v265
        %445 = vmatmul.mubr.f32.gmra.mxu0 %v264
        %v446 = vpop.f32.mrf.mxu0
        %v447 = vadd.f32 0.0, %v446
        %v448 = vpop.f32.mrf.mxu0
        %449 = vmatprep.mubr.f32.mxu0 %v267
        %450 = vmatmul.mubr.f32.gmra.mxu0 %v266
        %v451 = vpop.f32.mrf.mxu0
        %v452 = vadd.f32 0.0, %v451
        %v453 = vpop.f32.mrf.mxu0
        %454 = vmatprep.mubr.f32.mxu0 %v269
        %455 = vmatmul.mubr.f32.gmra.mxu0 %v268
        %v456 = vpop.f32.mrf.mxu0
        %v457 = vadd.f32 0.0, %v456
        %v458 = vpop.f32.mrf.mxu0
        %459 = vmatprep.mubr.f32.mxu0 %v271
        %460 = vmatmul.mubr.f32.gmra.mxu0 %v270
        %v461 = vpop.f32.mrf.mxu0
        %v462 = vadd.f32 0.0, %v461
        %v463 = vpop.f32.mrf.mxu0
        %464 = vmatprep.mubr.f32.mxu0 %v273
        %465 = vmatmul.mubr.f32.gmra.mxu0 %v272
        %v466 = vpop.f32.mrf.mxu0
        %v467 = vadd.f32 0.0, %v466
        %v468 = vpop.f32.mrf.mxu0
        %469 = vmatprep.mubr.f32.mxu0 %v275
        %470 = vmatmul.mubr.f32.gmra.mxu0 %v274
        %v471 = vpop.f32.mrf.mxu0
        %v472 = vadd.f32 0.0, %v471
        %v473 = vpop.f32.mrf.mxu0
        %474 = vmatprep.mubr.f32.mxu0 %v277
        %475 = vmatmul.mubr.f32.gmra.mxu0 %v276
        %v476 = vpop.f32.mrf.mxu0
        %v477 = vadd.f32 0.0, %v476
        %v478 = vpop.f32.mrf.mxu0
        %479 = vdwg.mxu0
        %vm480 = vcmask 195584
        %v481 = vsel %vm480, %v377, -inf
        %v482 = vsel %vm480, %v382, -inf
        %v483 = vsel %vm480, %v387, -inf
        %v484 = vmax.f32 %v481, %v483
        %v485 = vsel %vm480, %v392, -inf
        %v486 = vmax.f32 %v482, %v485
        %v487 = vsel %vm480, %v397, -inf
        %v488 = vmax.f32 %v484, %v487
        %v489 = vsel %vm480, %v402, -inf
        %v490 = vmax.f32 %v486, %v489
        %v491 = vsel %vm480, %v407, -inf
        %v492 = vmax.f32 %v488, %v491
        %v493 = vmax.f32 %v492, %v490
        %v494 = vrot.slane %v493, 4
        %v495 = vmax.f32 %v493, %v494
        %v496 = vrot.slane %v495, 2
        %v497 = vmax.f32 %v495, %v496
        %v498 = vrot.slane %v497, 1
        %v499 = vmax.f32 %v497, %v498
        %v500 = vsel %vm480, %v412, -inf
        %v501 = vsel %vm480, %v417, -inf
        %v502 = vsel %vm480, %v422, -inf
        %v503 = vmax.f32 %v500, %v502
        %v504 = vsel %vm480, %v427, -inf
        %v505 = vmax.f32 %v501, %v504
        %v506 = vsel %vm480, %v432, -inf
        %v507 = vmax.f32 %v503, %v506
        %v508 = vsel %vm480, %v437, -inf
        %v509 = vmax.f32 %v505, %v508
        %v510 = vsel %vm480, %v442, -inf
        %v511 = vmax.f32 %v507, %v510
        %v512 = vmax.f32 %v511, %v509
        %v513 = vrot.slane %v512, 4
        %v514 = vmax.f32 %v512, %v513
        %v515 = vrot.slane %v514, 2
        %v516 = vmax.f32 %v514, %v515
        %v517 = vrot.slane %v516, 1
        %v518 = vmax.f32 %v516, %v517
        %v519 = vsel %vm480, %v447, -inf
        %v520 = vsel %vm480, %v452, -inf
        %v521 = vsel %vm480, %v457, -inf
        %v522 = vmax.f32 %v519, %v521
        %v523 = vsel %vm480, %v462, -inf
        %v524 = vmax.f32 %v520, %v523
        %v525 = vsel %vm480, %v467, -inf
        %v526 = vmax.f32 %v522, %v525
        %v527 = vsel %vm480, %v472, -inf
        %v528 = vmax.f32 %v524, %v527
        %v529 = vsel %vm480, %v477, -inf
        %v530 = vmax.f32 %v526, %v529
        %v531 = vmax.f32 %v530, %v528
        %v532 = vrot.slane %v531, 4
        %v533 = vmax.f32 %v531, %v532
        %v534 = vrot.slane %v533, 2
        %v535 = vmax.f32 %v533, %v534
        %v536 = vrot.slane %v535, 1
        %v537 = vmax.f32 %v535, %v536
        %v538 = vld [vmem:[%s2] sm:$0xff]
        %v539 = vld [vmem:[%s2 + $0x8] sm:$0xff]
        %v540 = vld [vmem:[%s2 + $0x10] sm:$0xff]
        %v541 = vld [vmem:[%s3] sm:$0x1]
        %v543 = vlaneseq
        %v544 = vshrl.u32 %v543, 7
        %v545 = vsub.s32 0, %v544
        %v546 = vrot.slane %v541, %v545
        %vm551 = vcmask 1041409
        %v552 = vsel %vm551, %v518, %v499
        %vm553 = vcmask 1042434
        %v554 = vsel %vm553, %v537, %v552
        %v555 = vsel %vm480, %v554, 0
        %557 = vmatprep.subr.mxu0 0.0
        %558 = vmatpush1.msra.mxu0 0.0
        %559 = vmatprep.subr.mxu0 0.0
        %560 = vmatpush1.msra.mxu0 0.0
        %561 = vmatprep.subr.mxu0 0.0
        %562 = vmatpush1.msra.mxu0 0.0
        %563 = vmatprep.subr.mxu0 0.0
        %564 = vmatpush1.msra.mxu0 0.0
        %565 = vmatprep.subr.mxu0 0.0
        %566 = vmatpush1.msra.mxu0 0.0
        %567 = vmatprep.subr.mxu0 0.0
        %568 = vmatpush1.msra.mxu0 0.0
        %569 = vmatprep.subr.mxu0 0.0
        %570 = vmatpush1.msra.mxu0 0.0
        %571 = vmatprep.subr.mxu0 0.0
        %572 = vmatpush1.msra.mxu0 0.0
        %573 = vmatprep.subr.mxu0 0.0
        %574 = vmatpush1.msra.mxu0 0.0
        %575 = vmatprep.subr.mxu0 0.0
        %576 = vmatpush1.msra.mxu0 0.0
        %577 = vmatprep.subr.mxu0 0.0
        %578 = vmatpush1.msra.mxu0 0.0
        %579 = vmatprep.subr.mxu0 0.0
        %580 = vmatpush1.msra.mxu0 0.0
        %581 = vmatprep.subr.mxu0 0.0
        %582 = vmatpush1.msra.mxu0 0.0
        %583 = vmatprep.subr.mxu0 0.0
        %584 = vmatpush1.msra.mxu0 %v540
        %585 = vmatprep.subr.mxu0 0.0
        %586 = vmatpush1.msra.mxu0 %v539
        %587 = vmatprep.subr.mxu0 0.0
        %588 = vmatpush1.msra.mxu0 %v538
        %589 = vmatprep.subr.mxu0 0.0
        %590 = vmatpush2.msra.mxu0 0.0
        %591 = vmatprep.subr.mxu0 0.0
        %592 = vmatpush2.msra.mxu0 0.0
        %593 = vmatprep.subr.mxu0 0.0
        %594 = vmatpush2.msra.mxu0 0.0
        %595 = vmatprep.subr.mxu0 0.0
        %596 = vmatpush2.msra.mxu0 0.0
        %597 = vmatprep.subr.mxu0 0.0
        %598 = vmatpush2.msra.mxu0 0.0
        %599 = vmatprep.subr.mxu0 0.0
        %600 = vmatpush2.msra.mxu0 0.0
        %601 = vmatprep.subr.mxu0 0.0
        %602 = vmatpush2.msra.mxu0 0.0
        %603 = vmatprep.subr.mxu0 0.0
        %604 = vmatpush2.msra.mxu0 0.0
        %605 = vmatprep.subr.mxu0 0.0
        %606 = vmatpush2.msra.mxu0 0.0
        %607 = vmatprep.subr.mxu0 0.0
        %608 = vmatpush2.msra.mxu0 0.0
        %609 = vmatprep.subr.mxu0 0.0
        %610 = vmatpush2.msra.mxu0 0.0
        %611 = vmatprep.subr.mxu0 0.0
        %612 = vmatpush2.msra.mxu0 0.0
        %613 = vmatprep.subr.mxu0 0.0
        %614 = vmatpush2.msra.mxu0 0.0
        %615 = vmatprep.subr.mxu0 0.0
        %616 = vmatpush2.msra.mxu0 0.0
        %617 = vmatprep.subr.mxu0 0.0
        %618 = vmatpush2.msra.mxu0 0.0
        %619 = vmatprep.subr.mxu0 0.0
        %620 = vmatpush2.msra.mxu0 0.0
        %621 = vmatprep.mubr.f32.mxu0 0.0
        %622 = vmatmul.mubr.f32.gmra.mxu0 %v555
        %v623 = vpop.f32.mrf.mxu0
        %v624 = vadd.f32 %v546, %v623
        %v625 = vpop.f32.mrf.mxu0
        %626 = vdwg.mxu0
        %vm627 = vcmask 1042432
        %v628 = vsel %vm627, %v624, -inf
        %629 = vmax.xlane.f32.xlu0 %v628
        %v630 = vpop.xlane.xlu0 %629
        %v631 = vsub.f32 %v624, %v630
        %v632 = vmul.f32 %v631, 1.442695
        %v633 = vpow.pop %v632
        %v634 = vsel %vm627, %v633, 0.0
        %635 = vadd.xlane.f32.xlu0 %v634
        %v636 = vpop.xlane.xlu0 %635
        %v637 = vrcp.pop %v636
        %v638 = vmul.f32 %v633, %v637
        %639 = vst [vmem:[%s235] sm:$0x7] %v638
        %p640 = scmp.lt.s32.totalorder %s18, 1
        %s641 = scalar_select %p640, %s18, 1
        %s642 = smul.addr %s641, 4
        %s643 = scalar_lea.vmem %s4, %s642
        // Predicated region
        $region41: #{tpu_custom_call.1} parent=35 // pred_check
          %p644 = pneg %p130
        $region42: #{tpu_custom_call.1} parent=35 // pred_check_branch
          %646 = sbr.rel (%p644) target = $region44
        $region43: #{tpu_custom_call.1} parent=35 // pred_region
          _
        $region44: #{tpu_custom_call.1} parent=35 // pred_fallthru
          _
      $region36: #{tpu_custom_call.1} parent=5 // pred_fallthru
        _
      %p647 = scmp.le.s32.totalorder 2, %s13
      // Predicated region
      $region45: #{tpu_custom_call.1} parent=5 // pred_check
        %p648 = pneg %p647
      $region46: #{tpu_custom_call.1} parent=5 // pred_check_branch
        %650 = sbr.rel (%p648) target = $region48
      $region47: #{tpu_custom_call.1} parent=5 // pred_region
        %s651 = ssub.s32 %s13, 2
        // Predicated region
        $region49: #{tpu_custom_call.1} parent=47 // pred_check
          %p652 = pneg %p136
        $region50: #{tpu_custom_call.1} parent=47 // pred_check_branch
          %654 = sbr.rel (%p652) target = $region52
        $region51: #{tpu_custom_call.1} parent=47 // pred_region
          %p655 = scmp.lt.s32.totalorder %s19, 1
          %s656 = scalar_select %p655, %s19, 1
          %s657 = smul.addr %s656, 4
          %s658 = scalar_lea.vmem %s4, %s657
        $region52: #{tpu_custom_call.1} parent=47 // pred_fallthru
          _
      $region48: #{tpu_custom_call.1} parent=5 // pred_fallthru
        _
    $region6: #{tpu_custom_call.1} parent=1 // loop_footer
      %s17 = sadd.s32 1, %s13
    $region7: #{tpu_custom_call.1} parent=1 // loop_footer_branch
      %12 = sbr.rel target = $region3
    $region8: #{tpu_custom_call.1} parent=1 // loop_exit
      _
    %659 = vsyncpa [#allocation3], 1
    %s660 = scalar_lea.sflag [#allocation3], 1
    %661 = vsyncpa %s660, 1

</llo_original>
